<compile_context>
chip_gen: v6e
topology: v6e:2x2x1
jax: 0.10.0
libtpu: 0.0.40
codegen_flags: <defaults>
</compile_context>

<pallas_src>
import math
import functools
import numpy as np
import jax
import jax.numpy as jnp
from jax.experimental import pallas as pl
from jax.experimental.pallas import tpu as pltpu

# ---------------- module hyperparameters (deterministic, set in-script) ----------------
SAMPLE_RATE = 16000
FFT_SIZE = 256
HOP_SIZE = 64
MEL_SIZE = 80
F_MIN = 0.0
F_MAX = 8000.0
MIN_LEVEL_DB = -100.0

N_FREQS_FULL = FFT_SIZE // 2 + 1   # 129 onesided STFT bins (torchaudio convention)
N_FREQS = FFT_SIZE // 2            # 128: Nyquist bin dropped (its slaney fb row is all zeros)
MEL_PAD = 128                      # lane-dense output width (mel padded 80 -> 128 with zeros)
AMIN = 1e-10                       # amplitude floor before log (benign: -200 dB clips to 0)

# ---------------- mel filterbank (non-HTK, slaney norm) — parameter setup (glue) --------
_F_SP = 200.0 / 3.0
_MIN_LOG_HZ = 1000.0
_LOGSTEP = math.log(6.4) / 27.0
_MIN_LOG_MEL = _MIN_LOG_HZ / _F_SP


def _hertz2mel(hz):
    hz = np.asarray(hz, np.float64)
    mel = hz / _F_SP
    log_branch = _MIN_LOG_MEL + np.log(np.maximum(hz, 1e-12) / _MIN_LOG_HZ) / _LOGSTEP
    return np.where(hz >= _MIN_LOG_HZ, log_branch, mel)


def _mel2hertz(mel):
    mel = np.asarray(mel, np.float64)
    hz = _F_SP * mel
    return np.where(
        mel >= _MIN_LOG_MEL, _MIN_LOG_HZ * np.exp(_LOGSTEP * (mel - _MIN_LOG_MEL)), hz
    )


def create_fb_matrix(n_freqs, f_min, f_max, n_mels, sample_rate):
    all_freqs = np.linspace(0, sample_rate // 2, n_freqs)
    m_min = _hertz2mel(f_min)
    m_max = _hertz2mel(f_max)
    m_pts = np.linspace(m_min, m_max, n_mels + 2)
    f_pts = _mel2hertz(m_pts)
    f_diff = f_pts[1:] - f_pts[:-1]
    slopes = f_pts[None, :] - all_freqs[:, None]              # (n_freqs, n_mels+2)
    down_slopes = -1.0 * slopes[:, :-2] / f_diff[:-1]
    up_slopes = slopes[:, 2:] / f_diff[1:]
    fb = np.maximum(np.minimum(down_slopes, up_slopes), 0.0)
    enorm = 2.0 / (f_pts[2 : n_mels + 2] - f_pts[:n_mels])    # slaney norm
    fb = fb * enorm[None, :]
    return fb.astype(np.float32)                              # (n_freqs, n_mels)


@functools.lru_cache(maxsize=None)
def _make_constant_operands():
    # Hann window (periodic, torch.hann_window default) folded into the DFT basis.
    n = np.arange(FFT_SIZE)
    k = np.arange(N_FREQS)                                    # Nyquist bin dropped (exact)
    win = 0.5 - 0.5 * np.cos(2.0 * np.pi * n / FFT_SIZE)
    ang = 2.0 * np.pi * np.outer(n, k) / FFT_SIZE
    cos_b = (win[:, None] * np.cos(ang)).astype(np.float32)   # (n_fft, 128)
    sin_b = (win[:, None] * np.sin(ang)).astype(np.float32)   # (n_fft, 128)

    fb_full = create_fb_matrix(N_FREQS_FULL, F_MIN, F_MAX, MEL_SIZE, SAMPLE_RATE)
    fb = np.zeros((N_FREQS, MEL_PAD), np.float32)             # (128, 128) lane-dense
    fb[:, :MEL_SIZE] = fb_full[:N_FREQS, :]                   # drop zero Nyquist row, pad cols

    return (
        jnp.asarray(cos_b, dtype=jnp.bfloat16),
        jnp.asarray(sin_b, dtype=jnp.bfloat16),
        jnp.asarray(fb, dtype=jnp.float32),
    )


# ---------------- Pallas kernel: DFT matmuls + magnitude + mel matmul + dB norm ----------
def mel_kernel(frames_ref, cos_ref, sin_ref, fb_ref, out_ref, *, scale, amin):
    x = frames_ref[...]                                                   # (TF, 256) bf16
    re = jnp.dot(x, cos_ref[...], preferred_element_type=jnp.float32)     # (TF, 128) f32
    im = jnp.dot(x, sin_ref[...], preferred_element_type=jnp.float32)     # (TF, 128) f32
    mag = jnp.sqrt(re * re + im * im)                                     # power=1 magnitude
    mel = jnp.dot(mag, fb_ref[...], preferred_element_type=jnp.float32)   # (TF, 128)
    # amp2db + dBNorm fused: clip((20*log10(mel) - m)/(-m), 0, 1)
    #                      = clip(ln(max(mel, amin)) * scale + 1, 0, 1)
    out_ref[...] = jnp.clip(jnp.log(jnp.maximum(mel, amin)) * scale + 1.0, 0.0, 1.0)


# ---------------- wrapper: framing (glue) + pallas_call ---------------------------------
def mel_spectrogram(audio, *, frame_tile=256):
    # layout: audio (B, T) -> mel (B, n_mels, n_frames)  [matches PyTorch output]
    audio = audio.astype(jnp.float32)
    B, T = audio.shape

    # center=True reflect padding + framing (torchaudio Spectrogram defaults)
    # TODO(synk): reflect padding + hop-strided frame extraction kept as plain-JAX glue;
    #             moving framing in-kernel (manual DMA of overlapping hop chunks) would cut
    #             input HBM traffic ~4x but needs hand-rolled double buffering to stay fast.
    pad = FFT_SIZE // 2
    padded = jnp.pad(audio, ((0, 0), (pad, pad)), mode="reflect")
    n_frames = T // HOP_SIZE + 1
    idx = (jnp.arange(n_frames) * HOP_SIZE)[:, None] + jnp.arange(FFT_SIZE)[None, :]
    frames = padded[:, idx]                           # (B, n_frames, n_fft)
    frames = frames.reshape(B * n_frames, FFT_SIZE)

    total = B * n_frames
    ft = max(8, min(int(frame_tile), ((total + 7) // 8) * 8))   # multiple of 8, no huge overpad
    total_pad = ((total + ft - 1) // ft) * ft
    frames = jnp.pad(frames, ((0, total_pad - total), (0, 0)))
    frames = frames.astype(jnp.bfloat16)              # half the HBM bytes, MXU-native dtype

    cos_b, sin_b, fb = _make_constant_operands()

    scale = (20.0 / math.log(10.0)) / (-MIN_LEVEL_DB)

    out = pl.pallas_call(
        functools.partial(mel_kernel, scale=scale, amin=AMIN),
        out_shape=jax.ShapeDtypeStruct((total_pad, MEL_PAD), jnp.float32),
        grid_spec=pltpu.PrefetchScalarGridSpec(
            num_scalar_prefetch=0,
            grid=(total_pad // ft,),
            in_specs=[
                pl.BlockSpec((ft, FFT_SIZE), lambda i: (i, 0)),       # frame tile (bf16)
                pl.BlockSpec((FFT_SIZE, N_FREQS), lambda i: (0, 0)),  # cos basis (full, bf16)
                pl.BlockSpec((FFT_SIZE, N_FREQS), lambda i: (0, 0)),  # sin basis (full, bf16)
                pl.BlockSpec((N_FREQS, MEL_PAD), lambda i: (0, 0)),   # mel fb (full, f32)
            ],
            out_specs=pl.BlockSpec((ft, MEL_PAD), lambda i: (i, 0)),  # lane-dense output
        ),
        compiler_params=pltpu.CompilerParams(dimension_semantics=("parallel",)),
    )(frames, cos_b, sin_b, fb)

    mel = out[:total, :MEL_SIZE].reshape(B, n_frames, MEL_SIZE)   # (B, n_frames, n_mels)
    return jnp.transpose(mel, (0, 2, 1))                          # (B, n_mels, n_frames)


if __name__ == "__main__":
    key = jax.random.PRNGKey(0)
    B, T = 2, 1024
    audio = jax.random.normal(key, (B, T), dtype=jnp.float32)

    mel = mel_spectrogram(audio)
    jax.block_until_ready(mel)

    expected_frames = T // HOP_SIZE + 1
    assert mel.shape == (B, MEL_SIZE, expected_frames), mel.shape
    assert mel.dtype == jnp.float32
    assert bool(jnp.all(jnp.isfinite(mel)))
    assert bool(jnp.all((mel >= 0.0) & (mel <= 1.0)))
    print("KERNEL_OK")
</pallas_src>

<mosaic_0001>
module attributes {stable_mosaic.version = 11 : i64} {
  func.func @mel_kernel(%arg0: i32, %arg1: memref<40x256xbf16, #tpu.memory_space<vmem>>, %arg2: memref<256x128xbf16, #tpu.memory_space<vmem>>, %arg3: memref<256x128xbf16, #tpu.memory_space<vmem>>, %arg4: memref<128x128xf32, #tpu.memory_space<vmem>>, %arg5: memref<40x128xf32, #tpu.memory_space<vmem>>) attributes {dimension_semantics = [#tpu.dimension_semantics<parallel>], iteration_bounds = array<i64: 1>, scalar_prefetch = 0 : i64, scratch_operands = 0 : i64, tpu.core_type = #tpu.core_type<tc>, window_params = [{transform_indices = @transform_0, window_bounds = array<i64: 40, 256>}, {pipeline_mode = #tpu.pipeline_mode<synchronous>, transform_indices = @transform_1, window_bounds = array<i64: 256, 128>}, {pipeline_mode = #tpu.pipeline_mode<synchronous>, transform_indices = @transform_2, window_bounds = array<i64: 256, 128>}, {pipeline_mode = #tpu.pipeline_mode<synchronous>, transform_indices = @transform_3, window_bounds = array<i64: 128, 128>}, {transform_indices = @transform_4, window_bounds = array<i64: 40, 128>}]} {
    %c0 = arith.constant 0 : index
    %c0_0 = arith.constant 0 : index
    %0 = vector.load %arg1[%c0, %c0_0] : memref<40x256xbf16, #tpu.memory_space<vmem>>, vector<40x256xbf16>
    %c0_1 = arith.constant 0 : index
    %c0_2 = arith.constant 0 : index
    %1 = vector.load %arg2[%c0_1, %c0_2] : memref<256x128xbf16, #tpu.memory_space<vmem>>, vector<256x128xbf16>
    %cst = arith.constant dense<0.000000e+00> : vector<40x128xf32>
    %2 = tpu.matmul %0, %1, %cst {dimension_numbers = #tpu.dot_dimension_numbers<[1], [0], [0], [1], [0, 0, 1, 1], [], []>} : vector<40x256xbf16>, vector<256x128xbf16>, vector<40x128xf32> -> vector<40x128xf32>
    %c0_3 = arith.constant 0 : index
    %c0_4 = arith.constant 0 : index
    %3 = vector.load %arg3[%c0_3, %c0_4] : memref<256x128xbf16, #tpu.memory_space<vmem>>, vector<256x128xbf16>
    %cst_5 = arith.constant dense<0.000000e+00> : vector<40x128xf32>
    %4 = tpu.matmul %0, %3, %cst_5 {dimension_numbers = #tpu.dot_dimension_numbers<[1], [0], [0], [1], [0, 0, 1, 1], [], []>} : vector<40x256xbf16>, vector<256x128xbf16>, vector<40x128xf32> -> vector<40x128xf32>
    %5 = arith.mulf %2, %2 : vector<40x128xf32>
    %6 = arith.mulf %4, %4 : vector<40x128xf32>
    %7 = arith.addf %5, %6 : vector<40x128xf32>
    %8 = math.sqrt %7 : vector<40x128xf32>
    %c0_6 = arith.constant 0 : index
    %c0_7 = arith.constant 0 : index
    %9 = vector.load %arg4[%c0_6, %c0_7] : memref<128x128xf32, #tpu.memory_space<vmem>>, vector<128x128xf32>
    %cst_8 = arith.constant dense<0.000000e+00> : vector<40x128xf32>
    %10 = tpu.matmul %8, %9, %cst_8 {dimension_numbers = #tpu.dot_dimension_numbers<[1], [0], [0], [1], [0, 0, 1, 1], [], []>} : vector<40x128xf32>, vector<128x128xf32>, vector<40x128xf32> -> vector<40x128xf32>
    %cst_9 = arith.constant 1.000000e-10 : f32
    %11 = vector.broadcast %cst_9 : f32 to vector<40x128xf32>
    %12 = arith.maximumf %10, %11 : vector<40x128xf32>
    %13 = math.log %12 : vector<40x128xf32>
    %cst_10 = arith.constant 0.0868588984 : f32
    %14 = vector.broadcast %cst_10 : f32 to vector<40x128xf32>
    %15 = arith.mulf %13, %14 : vector<40x128xf32>
    %cst_11 = arith.constant 1.000000e+00 : f32
    %16 = vector.broadcast %cst_11 : f32 to vector<40x128xf32>
    %17 = arith.addf %15, %16 : vector<40x128xf32>
    %cst_12 = arith.constant 0.000000e+00 : f32
    %cst_13 = arith.constant 1.000000e+00 : f32
    %18 = vector.broadcast %cst_12 : f32 to vector<40x128xf32>
    %19 = arith.maximumf %18, %17 : vector<40x128xf32>
    %20 = vector.broadcast %cst_13 : f32 to vector<40x128xf32>
    %21 = arith.minimumf %20, %19 : vector<40x128xf32>
    %c0_14 = arith.constant 0 : index
    %c0_15 = arith.constant 0 : index
    %22 = vector.load %arg5[%c0_14, %c0_15] : memref<40x128xf32, #tpu.memory_space<vmem>>, vector<40x128xf32>
    tpu.vector_store %arg5[%c0_14, %c0_15], %21 {strides = array<i32>} : memref<40x128xf32, #tpu.memory_space<vmem>>, vector<40x128xf32>,
    return
  }
  func.func @transform_0(%arg0: i32) -> (i32, i32) {
    %c0_i32 = arith.constant 0 : i32
    %c0_i32_0 = arith.constant 0 : i32
    return %arg0, %c0_i32 : i32, i32
  }
  func.func @transform_1(%arg0: i32) -> (i32, i32) {
    %c0_i32 = arith.constant 0 : i32
    %c0_i32_0 = arith.constant 0 : i32
    %c0_i32_1 = arith.constant 0 : i32
    return %c0_i32, %c0_i32_0 : i32, i32
  }
  func.func @transform_2(%arg0: i32) -> (i32, i32) {
    %c0_i32 = arith.constant 0 : i32
    %c0_i32_0 = arith.constant 0 : i32
    %c0_i32_1 = arith.constant 0 : i32
    return %c0_i32, %c0_i32_0 : i32, i32
  }
  func.func @transform_3(%arg0: i32) -> (i32, i32) {
    %c0_i32 = arith.constant 0 : i32
    %c0_i32_0 = arith.constant 0 : i32
    %c0_i32_1 = arith.constant 0 : i32
    return %c0_i32, %c0_i32_0 : i32, i32
  }
  func.func @transform_4(%arg0: i32) -> (i32, i32) {
    %c0_i32 = arith.constant 0 : i32
    %c0_i32_0 = arith.constant 0 : i32
    return %arg0, %c0_i32 : i32, i32
  }
}

</mosaic_0001>

<llo_original>
// kernel: tpu_custom_call.1
$region0: #{tpu_custom_call.1}
  #allocation0 [shape = 'u32[]', space=smem, size = 0x4, offset = 0x4, fixed_abs, tag = 'smem constant byte address 0x4 - core index']
  #allocation1 [shape = 'u32[144,128]{1,0:T(1,128)}', space=vmem, size = 0x12000, scoped, tag = 'internal scratch']
  %s0 = inlined_call_operand.hbm [shape: bf16[40,256], index: 0, kind: input, shape index: {}]
  %s1 = inlined_call_operand.hbm [shape: bf16[256,128], index: 1, kind: input, shape index: {}]
  %s2 = inlined_call_operand.hbm [shape: bf16[256,128], index: 2, kind: input, shape index: {}]
  %s3 = inlined_call_operand.hbm [shape: f32[128,128], index: 3, kind: input, shape index: {}]
  %s4 = inlined_call_operand.hbm [shape: f32[40,128], index: 4, kind: output, shape index: {}]
  %s5 = sld [smem:[#allocation0]]
  $region42: #{tpu_custom_call.1} parent=0
    _
  %s7 = ssub.s32 1, %s5
  %s8 = scalar_select 0, %s7, %s5
  $region1: #{tpu_custom_call.1} parent=0
    #allocation2 [shape = 'u8[20480]{0}', space=vmem, size = 0x5000, scoped, tag = 'input window, operand 0, single buffered']
    #allocation3 [shape = 's32[1]{0}', space=sflag, size = 0x4, scoped, tag = 'scoped memory for tpu_custom_call.1']
    #allocation4 [shape = 's32[1]{0}', space=sflag, size = 0x4, scoped, tag = 'scoped memory for tpu_custom_call.1']
    #allocation5 [shape = 'u8[65536]{0}', space=vmem, size = 0x10000, scoped, tag = 'input window, operand 1, single buffered']
    #allocation6 [shape = 's32[1]{0}', space=sflag, size = 0x4, scoped, tag = 'scoped memory for tpu_custom_call.1']
    #allocation7 [shape = 'u8[65536]{0}', space=vmem, size = 0x10000, scoped, tag = 'input window, operand 2, single buffered']
    #allocation8 [shape = 'u8[65536]{0}', space=vmem, size = 0x10000, scoped, tag = 'input window, operand 3, single buffered']
    #allocation9 [shape = 's32[1]{0}', space=sflag, size = 0x4, scoped, tag = 'scoped memory for tpu_custom_call.1']
    #allocation10 [shape = 'u8[20480]{0}', space=vmem, size = 0x5000, scoped, tag = 'output window, operand 0, single buffered']
    %9 = vsyncpa [#allocation3], 0
    %10 = vsyncpa [#allocation6], 0
    %11 = vsyncpa [#allocation9], 0
    %12 = vsyncpa [#allocation4], 0
    // Predicated region
    $region2: #{tpu_custom_call.1} parent=1 // pred_check
      _
    $region3: #{tpu_custom_call.1} parent=1 // pred_check_branch
      %14 = sbr.rel (0) target = $region5
    $region4: #{tpu_custom_call.1} parent=1 // pred_region
      %s16 = ssub.s32 640, 640
      %17 = vsyncadd [#allocation3], %s16
      %s18 = sshll.u32 [#allocation2], 4
      %s19 = int_to_ptr.vmem [resolvable:$true] %s18
      %24 = dma.hbm_to_vmem [thread:$0]  %s0, 640, %s19, [#allocation3], 128, 128, 8
    $region5: #{tpu_custom_call.1} parent=1 // pred_fallthru
      _
    // Predicated region
    $region6: #{tpu_custom_call.1} parent=1 // pred_check
      _
    $region7: #{tpu_custom_call.1} parent=1 // pred_check_branch
      %26 = sbr.rel (0) target = $region9
    $region8: #{tpu_custom_call.1} parent=1 // pred_region
      %s28 = ssub.s32 2048, 2048
      %29 = vsyncadd [#allocation6], %s28
      %s30 = sshll.u32 [#allocation5], 4
      %s31 = int_to_ptr.vmem [resolvable:$true] %s30
      %36 = dma.hbm_to_vmem [thread:$0]  %s1, 2048, %s31, [#allocation6], 64, 64, 4
    $region9: #{tpu_custom_call.1} parent=1 // pred_fallthru
      _
    // Predicated region
    $region10: #{tpu_custom_call.1} parent=1 // pred_check
      _
    $region11: #{tpu_custom_call.1} parent=1 // pred_check_branch
      %38 = sbr.rel (0) target = $region13
    $region12: #{tpu_custom_call.1} parent=1 // pred_region
      %s40 = ssub.s32 2048, 2048
      %41 = vsyncadd [#allocation6], %s40
      %s42 = sshll.u32 [#allocation7], 4
      %s43 = int_to_ptr.vmem [resolvable:$true] %s42
      %48 = dma.hbm_to_vmem [thread:$0]  %s2, 2048, %s43, [#allocation6], 64, 64, 4
    $region13: #{tpu_custom_call.1} parent=1 // pred_fallthru
      _
    // Predicated region
    $region14: #{tpu_custom_call.1} parent=1 // pred_check
      _
    $region15: #{tpu_custom_call.1} parent=1 // pred_check_branch
      %50 = sbr.rel (0) target = $region17
    $region16: #{tpu_custom_call.1} parent=1 // pred_region
      %s52 = ssub.s32 2048, 2048
      %53 = vsyncadd [#allocation9], %s52
      %s54 = sshll.u32 [#allocation8], 4
      %s55 = int_to_ptr.vmem [resolvable:$true] %s54
      %60 = dma.hbm_to_vmem [thread:$0]  %s3, 2048, %s55, [#allocation9], 128, 128, 8
    $region17: #{tpu_custom_call.1} parent=1 // pred_fallthru
      _
    // Predicated region
    $region18: #{tpu_custom_call.1} parent=1 // pred_check
      _
    $region19: #{tpu_custom_call.1} parent=1 // pred_check_branch
      %62 = sbr.rel (0) target = $region21
    $region20: #{tpu_custom_call.1} parent=1 // pred_region
      %63 = dma.done [#allocation3], 640
    $region21: #{tpu_custom_call.1} parent=1 // pred_fallthru
      _
    // Predicated region
    $region22: #{tpu_custom_call.1} parent=1 // pred_check
      _
    $region23: #{tpu_custom_call.1} parent=1 // pred_check_branch
      %65 = sbr.rel (0) target = $region25
    $region24: #{tpu_custom_call.1} parent=1 // pred_region
      %66 = dma.done [#allocation6], 2048
    $region25: #{tpu_custom_call.1} parent=1 // pred_fallthru
      _
    // Predicated region
    $region26: #{tpu_custom_call.1} parent=1 // pred_check
      _
    $region27: #{tpu_custom_call.1} parent=1 // pred_check_branch
      %68 = sbr.rel (0) target = $region29
    $region28: #{tpu_custom_call.1} parent=1 // pred_region
      %69 = dma.done [#allocation6], 2048
    $region29: #{tpu_custom_call.1} parent=1 // pred_fallthru
      _
    // Predicated region
    $region30: #{tpu_custom_call.1} parent=1 // pred_check
      _
    $region31: #{tpu_custom_call.1} parent=1 // pred_check_branch
      %71 = sbr.rel (0) target = $region33
    $region32: #{tpu_custom_call.1} parent=1 // pred_region
      %72 = dma.done [#allocation9], 2048
    $region33: #{tpu_custom_call.1} parent=1 // pred_fallthru
      _
    %v74 = vld [vmem:[#allocation2] sm:$0xff]
    %v75 = vld [vmem:[#allocation2 + $0x8] sm:$0xff]
    %v76 = vld [vmem:[#allocation2 + $0x10] sm:$0xff]
    %v77 = vld [vmem:[#allocation2 + $0x18] sm:$0xff]
    %v78 = vld [vmem:[#allocation2 + $0x20] sm:$0xff]
    %v79 = vld [vmem:[#allocation5] sm:$0xf]
    %v80 = vld [vmem:[#allocation5 + $0x4] sm:$0xf]
    %v81 = vld [vmem:[#allocation5 + $0x8] sm:$0xf]
    %v82 = vld [vmem:[#allocation5 + $0xc] sm:$0xf]
    %v83 = vld [vmem:[#allocation5 + $0x10] sm:$0xf]
    %v84 = vld [vmem:[#allocation5 + $0x14] sm:$0xf]
    %v85 = vld [vmem:[#allocation5 + $0x18] sm:$0xf]
    %v86 = vld [vmem:[#allocation5 + $0x1c] sm:$0xf]
    %v87 = vld [vmem:[#allocation5 + $0x20] sm:$0xf]
    %v88 = vld [vmem:[#allocation5 + $0x24] sm:$0xf]
    %v89 = vld [vmem:[#allocation5 + $0x28] sm:$0xf]
    %v90 = vld [vmem:[#allocation5 + $0x2c] sm:$0xf]
    %v91 = vld [vmem:[#allocation5 + $0x30] sm:$0xf]
    %v92 = vld [vmem:[#allocation5 + $0x34] sm:$0xf]
    %v93 = vld [vmem:[#allocation5 + $0x38] sm:$0xf]
    %v94 = vld [vmem:[#allocation5 + $0x3c] sm:$0xf]
    %v95 = vld [vmem:[#allocation5 + $0x40] sm:$0xf]
    %v96 = vld [vmem:[#allocation5 + $0x44] sm:$0xf]
    %v97 = vld [vmem:[#allocation5 + $0x48] sm:$0xf]
    %v98 = vld [vmem:[#allocation5 + $0x4c] sm:$0xf]
    %v99 = vld [vmem:[#allocation5 + $0x50] sm:$0xf]
    %v100 = vld [vmem:[#allocation5 + $0x54] sm:$0xf]
    %v101 = vld [vmem:[#allocation5 + $0x58] sm:$0xf]
    %v102 = vld [vmem:[#allocation5 + $0x5c] sm:$0xf]
    %v103 = vld [vmem:[#allocation5 + $0x60] sm:$0xf]
    %v104 = vld [vmem:[#allocation5 + $0x64] sm:$0xf]
    %v105 = vld [vmem:[#allocation5 + $0x68] sm:$0xf]
    %v106 = vld [vmem:[#allocation5 + $0x6c] sm:$0xf]
    %v107 = vld [vmem:[#allocation5 + $0x70] sm:$0xf]
    %v108 = vld [vmem:[#allocation5 + $0x74] sm:$0xf]
    %v109 = vld [vmem:[#allocation5 + $0x78] sm:$0xf]
    %v110 = vld [vmem:[#allocation5 + $0x7c] sm:$0xf]
    %v116 = vunpack.c.l.b16 %v74
    %v117 = vunpack.c.h.b16 %v74
    %v118 = vunpack.c.l.b16 %v75
    %v119 = vunpack.c.h.b16 %v75
    %v120 = vunpack.c.l.b16 %v76
    %v121 = vunpack.c.h.b16 %v76
    %v122 = vunpack.c.l.b16 %v77
    %v123 = vunpack.c.h.b16 %v77
    %v124 = vunpack.c.l.b16 %v78
    %v125 = vunpack.c.h.b16 %v78
    %v126 = vpack.c.b16 %v118, %v116
    %v127 = vpack.c.b16 %v119, %v117
    %v128 = vpack.c.b16 %v122, %v120
    %v129 = vpack.c.b16 %v123, %v121
    %v130 = vpack.c.b16 %v124, %v124
    %v131 = vpack.c.b16 %v125, %v125
    %v170 = vunpack.c.l.b16 %v79
    %v171 = vunpack.c.l.b16 %v80
    %v172 = vunpack.c.l.b16 %v81
    %v173 = vunpack.c.l.b16 %v82
    %v174 = vunpack.c.l.b16 %v83
    %v175 = vunpack.c.l.b16 %v84
    %v176 = vunpack.c.l.b16 %v85
    %v177 = vunpack.c.l.b16 %v86
    %v178 = vunpack.c.l.b16 %v87
    %v179 = vunpack.c.l.b16 %v88
    %v180 = vunpack.c.l.b16 %v89
    %v181 = vunpack.c.l.b16 %v90
    %v182 = vunpack.c.l.b16 %v91
    %v183 = vunpack.c.l.b16 %v92
    %v184 = vunpack.c.l.b16 %v93
    %v185 = vunpack.c.l.b16 %v94
    %v186 = vunpack.c.l.b16 %v95
    %v187 = vunpack.c.l.b16 %v96
    %v188 = vunpack.c.l.b16 %v97
    %v189 = vunpack.c.l.b16 %v98
    %v190 = vunpack.c.l.b16 %v99
    %v191 = vunpack.c.l.b16 %v100
    %v192 = vunpack.c.l.b16 %v101
    %v193 = vunpack.c.l.b16 %v102
    %v194 = vunpack.c.l.b16 %v103
    %v195 = vunpack.c.l.b16 %v104
    %v196 = vunpack.c.l.b16 %v105
    %v197 = vunpack.c.l.b16 %v106
    %v198 = vunpack.c.l.b16 %v107
    %v199 = vunpack.c.l.b16 %v108
    %v200 = vunpack.c.l.b16 %v109
    %v201 = vunpack.c.l.b16 %v110
    %v202 = vpack.c.b16 %v171, %v170
    %v203 = vpack.c.b16 %v173, %v172
    %v204 = vpack.c.b16 %v175, %v174
    %v205 = vpack.c.b16 %v177, %v176
    %v206 = vpack.c.b16 %v179, %v178
    %v207 = vpack.c.b16 %v181, %v180
    %v208 = vpack.c.b16 %v183, %v182
    %v209 = vpack.c.b16 %v185, %v184
    %v210 = vpack.c.b16 %v187, %v186
    %v211 = vpack.c.b16 %v189, %v188
    %v212 = vpack.c.b16 %v191, %v190
    %v213 = vpack.c.b16 %v193, %v192
    %v214 = vpack.c.b16 %v195, %v194
    %v215 = vpack.c.b16 %v197, %v196
    %v216 = vpack.c.b16 %v199, %v198
    %v217 = vpack.c.b16 %v201, %v200
    %234 = vmatprep.subr.bf16.mxu0 0
    %235 = vmatpush1.bf16.msra.mxu0 %v209
    %236 = vmatprep.subr.bf16.mxu0 0
    %237 = vmatpush1.bf16.msra.mxu0 %v208
    %238 = vmatprep.subr.bf16.mxu0 0
    %239 = vmatpush1.bf16.msra.mxu0 %v207
    %240 = vmatprep.subr.bf16.mxu0 0
    %241 = vmatpush1.bf16.msra.mxu0 %v206
    %242 = vmatprep.subr.bf16.mxu0 0
    %243 = vmatpush1.bf16.msra.mxu0 %v205
    %244 = vmatprep.subr.bf16.mxu0 0
    %245 = vmatpush1.bf16.msra.mxu0 %v204
    %246 = vmatprep.subr.bf16.mxu0 0
    %247 = vmatpush1.bf16.msra.mxu0 %v203
    %248 = vmatprep.subr.bf16.mxu0 0
    %249 = vmatpush1.bf16.msra.mxu0 %v202
    %250 = vmatprep.subr.bf16.mxu0 0
    %251 = vmatpush2.bf16.msra.mxu0 %v217
    %252 = vmatprep.subr.bf16.mxu0 0
    %253 = vmatpush2.bf16.msra.mxu0 %v216
    %254 = vmatprep.subr.bf16.mxu0 0
    %255 = vmatpush2.bf16.msra.mxu0 %v215
    %256 = vmatprep.subr.bf16.mxu0 0
    %257 = vmatpush2.bf16.msra.mxu0 %v214
    %258 = vmatprep.subr.bf16.mxu0 0
    %259 = vmatpush2.bf16.msra.mxu0 %v213
    %260 = vmatprep.subr.bf16.mxu0 0
    %261 = vmatpush2.bf16.msra.mxu0 %v212
    %262 = vmatprep.subr.bf16.mxu0 0
    %263 = vmatpush2.bf16.msra.mxu0 %v211
    %264 = vmatprep.subr.bf16.mxu0 0
    %265 = vmatpush2.bf16.msra.mxu0 %v210
    %266 = vmatprep.mubr.bf16.mxu0 %v127
    %267 = vmatmul.mubr.bf16.gmra.mxu0 %v126
    %v268 = vpop.f32.mrf.mxu0
    %v269 = vadd.f32 0.0, %v268
    %v270 = vpop.f32.mrf.mxu0
    %v271 = vpop.f32.mrf.mxu0
    %v272 = vadd.f32 0.0, %v271
    %v273 = vpop.f32.mrf.mxu0
    %274 = vmatprep.mubr.bf16.mxu0 %v129
    %275 = vmatmul.mubr.bf16.gmra.mxu0 %v128
    %v276 = vpop.f32.mrf.mxu0
    %v277 = vadd.f32 0.0, %v276
    %v278 = vpop.f32.mrf.mxu0
    %v279 = vpop.f32.mrf.mxu0
    %v280 = vadd.f32 0.0, %v279
    %v281 = vpop.f32.mrf.mxu0
    %282 = vmatprep.mubr.bf16.mxu0 %v131
    %283 = vmatmul.mubr.bf16.gmra.mxu0 %v130
    %v284 = vpop.f32.mrf.mxu0
    %v285 = vadd.f32 0.0, %v284
    %v286 = vpop.f32.mrf.mxu0
    %v287 = vpop.f32.mrf.mxu0
    %v288 = vpop.f32.mrf.mxu0
    %289 = vdwg.mxu0
    %v290 = vld [vmem:[#allocation7] sm:$0xf]
    %v291 = vld [vmem:[#allocation7 + $0x4] sm:$0xf]
    %v292 = vld [vmem:[#allocation7 + $0x8] sm:$0xf]
    %v293 = vld [vmem:[#allocation7 + $0xc] sm:$0xf]
    %v294 = vld [vmem:[#allocation7 + $0x10] sm:$0xf]
    %v295 = vld [vmem:[#allocation7 + $0x14] sm:$0xf]
    %v296 = vld [vmem:[#allocation7 + $0x18] sm:$0xf]
    %v297 = vld [vmem:[#allocation7 + $0x1c] sm:$0xf]
    %v298 = vld [vmem:[#allocation7 + $0x20] sm:$0xf]
    %v299 = vld [vmem:[#allocation7 + $0x24] sm:$0xf]
    %v300 = vld [vmem:[#allocation7 + $0x28] sm:$0xf]
    %v301 = vld [vmem:[#allocation7 + $0x2c] sm:$0xf]
    %v302 = vld [vmem:[#allocation7 + $0x30] sm:$0xf]
    %v303 = vld [vmem:[#allocation7 + $0x34] sm:$0xf]
    %v304 = vld [vmem:[#allocation7 + $0x38] sm:$0xf]
    %v305 = vld [vmem:[#allocation7 + $0x3c] sm:$0xf]
    %v306 = vld [vmem:[#allocation7 + $0x40] sm:$0xf]
    %v307 = vld [vmem:[#allocation7 + $0x44] sm:$0xf]
    %v308 = vld [vmem:[#allocation7 + $0x48] sm:$0xf]
    %v309 = vld [vmem:[#allocation7 + $0x4c] sm:$0xf]
    %v310 = vld [vmem:[#allocation7 + $0x50] sm:$0xf]
    %v311 = vld [vmem:[#allocation7 + $0x54] sm:$0xf]
    %v312 = vld [vmem:[#allocation7 + $0x58] sm:$0xf]
    %v313 = vld [vmem:[#allocation7 + $0x5c] sm:$0xf]
    %v314 = vld [vmem:[#allocation7 + $0x60] sm:$0xf]
    %v315 = vld [vmem:[#allocation7 + $0x64] sm:$0xf]
    %v316 = vld [vmem:[#allocation7 + $0x68] sm:$0xf]
    %v317 = vld [vmem:[#allocation7 + $0x6c] sm:$0xf]
    %v318 = vld [vmem:[#allocation7 + $0x70] sm:$0xf]
    %v319 = vld [vmem:[#allocation7 + $0x74] sm:$0xf]
    %v320 = vld [vmem:[#allocation7 + $0x78] sm:$0xf]
    %v321 = vld [vmem:[#allocation7 + $0x7c] sm:$0xf]
    %v354 = vunpack.c.l.b16 %v290
    %v355 = vunpack.c.l.b16 %v291
    %v356 = vunpack.c.l.b16 %v292
    %v357 = vunpack.c.l.b16 %v293
    %v358 = vunpack.c.l.b16 %v294
    %v359 = vunpack.c.l.b16 %v295
    %v360 = vunpack.c.l.b16 %v296
    %v361 = vunpack.c.l.b16 %v297
    %v362 = vunpack.c.l.b16 %v298
    %v363 = vunpack.c.l.b16 %v299
    %v364 = vunpack.c.l.b16 %v300
    %v365 = vunpack.c.l.b16 %v301
    %v366 = vunpack.c.l.b16 %v302
    %v367 = vunpack.c.l.b16 %v303
    %v368 = vunpack.c.l.b16 %v304
    %v369 = vunpack.c.l.b16 %v305
    %v370 = vunpack.c.l.b16 %v306
    %v371 = vunpack.c.l.b16 %v307
    %v372 = vunpack.c.l.b16 %v308
    %v373 = vunpack.c.l.b16 %v309
    %v374 = vunpack.c.l.b16 %v310
    %v375 = vunpack.c.l.b16 %v311
    %v376 = vunpack.c.l.b16 %v312
    %v377 = vunpack.c.l.b16 %v313
    %v378 = vunpack.c.l.b16 %v314
    %v379 = vunpack.c.l.b16 %v315
    %v380 = vunpack.c.l.b16 %v316
    %v381 = vunpack.c.l.b16 %v317
    %v382 = vunpack.c.l.b16 %v318
    %v383 = vunpack.c.l.b16 %v319
    %v384 = vunpack.c.l.b16 %v320
    %v385 = vunpack.c.l.b16 %v321
    %v386 = vpack.c.b16 %v355, %v354
    %v387 = vpack.c.b16 %v357, %v356
    %v388 = vpack.c.b16 %v359, %v358
    %v389 = vpack.c.b16 %v361, %v360
    %v390 = vpack.c.b16 %v363, %v362
    %v391 = vpack.c.b16 %v365, %v364
    %v392 = vpack.c.b16 %v367, %v366
    %v393 = vpack.c.b16 %v369, %v368
    %v394 = vpack.c.b16 %v371, %v370
    %v395 = vpack.c.b16 %v373, %v372
    %v396 = vpack.c.b16 %v375, %v374
    %v397 = vpack.c.b16 %v377, %v376
    %v398 = vpack.c.b16 %v379, %v378
    %v399 = vpack.c.b16 %v381, %v380
    %v400 = vpack.c.b16 %v383, %v382
    %v401 = vpack.c.b16 %v385, %v384
    %418 = vmatprep.subr.bf16.mxu0 0
    %419 = vmatpush1.bf16.msra.mxu0 %v393
    %420 = vmatprep.subr.bf16.mxu0 0
    %421 = vmatpush1.bf16.msra.mxu0 %v392
    %422 = vmatprep.subr.bf16.mxu0 0
    %423 = vmatpush1.bf16.msra.mxu0 %v391
    %424 = vmatprep.subr.bf16.mxu0 0
    %425 = vmatpush1.bf16.msra.mxu0 %v390
    %426 = vmatprep.subr.bf16.mxu0 0
    %427 = vmatpush1.bf16.msra.mxu0 %v389
    %428 = vmatprep.subr.bf16.mxu0 0
    %429 = vmatpush1.bf16.msra.mxu0 %v388
    %430 = vmatprep.subr.bf16.mxu0 0
    %431 = vmatpush1.bf16.msra.mxu0 %v387
    %432 = vmatprep.subr.bf16.mxu0 0
    %433 = vmatpush1.bf16.msra.mxu0 %v386
    %434 = vmatprep.subr.bf16.mxu0 0
    %435 = vmatpush2.bf16.msra.mxu0 %v401
    %436 = vmatprep.subr.bf16.mxu0 0
    %437 = vmatpush2.bf16.msra.mxu0 %v400
    %438 = vmatprep.subr.bf16.mxu0 0
    %439 = vmatpush2.bf16.msra.mxu0 %v399
    %440 = vmatprep.subr.bf16.mxu0 0
    %441 = vmatpush2.bf16.msra.mxu0 %v398
    %442 = vmatprep.subr.bf16.mxu0 0
    %443 = vmatpush2.bf16.msra.mxu0 %v397
    %444 = vmatprep.subr.bf16.mxu0 0
    %445 = vmatpush2.bf16.msra.mxu0 %v396
    %446 = vmatprep.subr.bf16.mxu0 0
    %447 = vmatpush2.bf16.msra.mxu0 %v395
    %448 = vmatprep.subr.bf16.mxu0 0
    %449 = vmatpush2.bf16.msra.mxu0 %v394
    %450 = vmatprep.mubr.bf16.mxu0 %v127
    %451 = vmatmul.mubr.bf16.gmra.mxu0 %v126
    %v452 = vpop.f32.mrf.mxu0
    %v453 = vadd.f32 0.0, %v452
    %v454 = vpop.f32.mrf.mxu0
    %v455 = vpop.f32.mrf.mxu0
    %v456 = vadd.f32 0.0, %v455
    %v457 = vpop.f32.mrf.mxu0
    %458 = vmatprep.mubr.bf16.mxu0 %v129
    %459 = vmatmul.mubr.bf16.gmra.mxu0 %v128
    %v460 = vpop.f32.mrf.mxu0
    %v461 = vadd.f32 0.0, %v460
    %v462 = vpop.f32.mrf.mxu0
    %v463 = vpop.f32.mrf.mxu0
    %v464 = vadd.f32 0.0, %v463
    %v465 = vpop.f32.mrf.mxu0
    %466 = vmatprep.mubr.bf16.mxu0 %v131
    %467 = vmatmul.mubr.bf16.gmra.mxu0 %v130
    %v468 = vpop.f32.mrf.mxu0
    %v469 = vadd.f32 0.0, %v468
    %v470 = vpop.f32.mrf.mxu0
    %v471 = vpop.f32.mrf.mxu0
    %v472 = vpop.f32.mrf.mxu0
    %473 = vdwg.mxu0
    %v474 = vmul.f32 %v269, %v269
    %v475 = vmul.f32 %v272, %v272
    %v476 = vmul.f32 %v277, %v277
    %v477 = vmul.f32 %v280, %v280
    %v478 = vmul.f32 %v285, %v285
    %v479 = vmul.f32 %v453, %v453
    %v480 = vmul.f32 %v456, %v456
    %v481 = vmul.f32 %v461, %v461
    %v482 = vmul.f32 %v464, %v464
    %v483 = vmul.f32 %v469, %v469
    %v484 = vadd.f32 %v474, %v479
    %v485 = vadd.f32 %v475, %v480
    %v486 = vadd.f32 %v476, %v481
    %v487 = vadd.f32 %v477, %v482
    %v488 = vadd.f32 %v478, %v483
    %v489 = vrsqrt.pop %v484
    %v490 = vmul.f32 %v484, %v489
    %vm491 = vcmp.eq.f32.partialorder %v484, inf
    %v492 = vsel %vm491, %v484, %v490
    %vm493 = vcmp.eq.f32.partialorder %v484, 0.0
    %v494 = vand.u32 %v484, 2147483648
    %v495 = vsel %vm493, %v494, %v492
    %v496 = vrsqrt.pop %v485
    %v497 = vmul.f32 %v485, %v496
    %vm498 = vcmp.eq.f32.partialorder %v485, inf
    %v499 = vsel %vm498, %v485, %v497
    %vm500 = vcmp.eq.f32.partialorder %v485, 0.0
    %v501 = vand.u32 %v485, 2147483648
    %v502 = vsel %vm500, %v501, %v499
    %v503 = vrsqrt.pop %v486
    %v504 = vmul.f32 %v486, %v503
    %vm505 = vcmp.eq.f32.partialorder %v486, inf
    %v506 = vsel %vm505, %v486, %v504
    %vm507 = vcmp.eq.f32.partialorder %v486, 0.0
    %v508 = vand.u32 %v486, 2147483648
    %v509 = vsel %vm507, %v508, %v506
    %v510 = vrsqrt.pop %v487
    %v511 = vmul.f32 %v487, %v510
    %vm512 = vcmp.eq.f32.partialorder %v487, inf
    %v513 = vsel %vm512, %v487, %v511
    %vm514 = vcmp.eq.f32.partialorder %v487, 0.0
    %v515 = vand.u32 %v487, 2147483648
    %v516 = vsel %vm514, %v515, %v513
    %v517 = vrsqrt.pop %v488
    %v518 = vmul.f32 %v488, %v517
    %vm519 = vcmp.eq.f32.partialorder %v488, inf
    %v520 = vsel %vm519, %v488, %v518
    %vm521 = vcmp.eq.f32.partialorder %v488, 0.0
    %v522 = vand.u32 %v488, 2147483648
    %v523 = vsel %vm521, %v522, %v520
    %v524 = vld [vmem:[#allocation8] sm:$0xff]
    %v525 = vld [vmem:[#allocation8 + $0x8] sm:$0xff]
    %v526 = vld [vmem:[#allocation8 + $0x10] sm:$0xff]
    %v527 = vld [vmem:[#allocation8 + $0x18] sm:$0xff]
    %v528 = vld [vmem:[#allocation8 + $0x20] sm:$0xff]
    %v529 = vld [vmem:[#allocation8 + $0x28] sm:$0xff]
    %v530 = vld [vmem:[#allocation8 + $0x30] sm:$0xff]
    %v531 = vld [vmem:[#allocation8 + $0x38] sm:$0xff]
    %v532 = vld [vmem:[#allocation8 + $0x40] sm:$0xff]
    %v533 = vld [vmem:[#allocation8 + $0x48] sm:$0xff]
    %v534 = vld [vmem:[#allocation8 + $0x50] sm:$0xff]
    %v535 = vld [vmem:[#allocation8 + $0x58] sm:$0xff]
    %v536 = vld [vmem:[#allocation8 + $0x60] sm:$0xff]
    %v537 = vld [vmem:[#allocation8 + $0x68] sm:$0xff]
    %v538 = vld [vmem:[#allocation8 + $0x70] sm:$0xff]
    %v539 = vld [vmem:[#allocation8 + $0x78] sm:$0xff]
    %540 = vmatprep.subr.mxu0 0.0
    %541 = vmatpush1.msra.mxu0 %v539
    %542 = vmatprep.subr.mxu0 0.0
    %543 = vmatpush1.msra.mxu0 %v538
    %544 = vmatprep.subr.mxu0 0.0
    %545 = vmatpush1.msra.mxu0 %v537
    %546 = vmatprep.subr.mxu0 0.0
    %547 = vmatpush1.msra.mxu0 %v536
    %548 = vmatprep.subr.mxu0 0.0
    %549 = vmatpush1.msra.mxu0 %v535
    %550 = vmatprep.subr.mxu0 0.0
    %551 = vmatpush1.msra.mxu0 %v534
    %552 = vmatprep.subr.mxu0 0.0
    %553 = vmatpush1.msra.mxu0 %v533
    %554 = vmatprep.subr.mxu0 0.0
    %555 = vmatpush1.msra.mxu0 %v532
    %556 = vmatprep.subr.mxu0 0.0
    %557 = vmatpush1.msra.mxu0 %v531
    %558 = vmatprep.subr.mxu0 0.0
    %559 = vmatpush1.msra.mxu0 %v530
    %560 = vmatprep.subr.mxu0 0.0
    %561 = vmatpush1.msra.mxu0 %v529
    %562 = vmatprep.subr.mxu0 0.0
    %563 = vmatpush1.msra.mxu0 %v528
    %564 = vmatprep.subr.mxu0 0.0
    %565 = vmatpush1.msra.mxu0 %v527
    %566 = vmatprep.subr.mxu0 0.0
    %567 = vmatpush1.msra.mxu0 %v526
    %568 = vmatprep.subr.mxu0 0.0
    %569 = vmatpush1.msra.mxu0 %v525
    %570 = vmatprep.subr.mxu0 0.0
    %571 = vmatpush1.msra.mxu0 %v524
    %572 = vmatprep.subr.mxu0 0.0
    %573 = vmatpush2.msra.mxu0 0.0
    %574 = vmatprep.subr.mxu0 0.0
    %575 = vmatpush2.msra.mxu0 0.0
    %576 = vmatprep.subr.mxu0 0.0
    %577 = vmatpush2.msra.mxu0 0.0
    %578 = vmatprep.subr.mxu0 0.0
    %579 = vmatpush2.msra.mxu0 0.0
    %580 = vmatprep.subr.mxu0 0.0
    %581 = vmatpush2.msra.mxu0 0.0
    %582 = vmatprep.subr.mxu0 0.0
    %583 = vmatpush2.msra.mxu0 0.0
    %584 = vmatprep.subr.mxu0 0.0
    %585 = vmatpush2.msra.mxu0 0.0
    %586 = vmatprep.subr.mxu0 0.0
    %587 = vmatpush2.msra.mxu0 0.0
    %588 = vmatprep.subr.mxu0 0.0
    %589 = vmatpush2.msra.mxu0 0.0
    %590 = vmatprep.subr.mxu0 0.0
    %591 = vmatpush2.msra.mxu0 0.0
    %592 = vmatprep.subr.mxu0 0.0
    %593 = vmatpush2.msra.mxu0 0.0
    %594 = vmatprep.subr.mxu0 0.0
    %595 = vmatpush2.msra.mxu0 0.0
    %596 = vmatprep.subr.mxu0 0.0
    %597 = vmatpush2.msra.mxu0 0.0
    %598 = vmatprep.subr.mxu0 0.0
    %599 = vmatpush2.msra.mxu0 0.0
    %600 = vmatprep.subr.mxu0 0.0
    %601 = vmatpush2.msra.mxu0 0.0
    %602 = vmatprep.subr.mxu0 0.0
    %603 = vmatpush2.msra.mxu0 0.0
    %604 = vmatprep.mubr.f32.mxu0 0.0
    %605 = vmatmul.mubr.f32.gmra.mxu0 %v495
    %v606 = vpop.f32.mrf.mxu0
    %v607 = vadd.f32 0.0, %v606
    %v608 = vpop.f32.mrf.mxu0
    %609 = vmatprep.mubr.f32.mxu0 0.0
    %610 = vmatmul.mubr.f32.gmra.mxu0 %v502
    %v611 = vpop.f32.mrf.mxu0
    %v612 = vadd.f32 0.0, %v611
    %v613 = vpop.f32.mrf.mxu0
    %614 = vmatprep.mubr.f32.mxu0 0.0
    %615 = vmatmul.mubr.f32.gmra.mxu0 %v509
    %v616 = vpop.f32.mrf.mxu0
    %v617 = vadd.f32 0.0, %v616
    %v618 = vpop.f32.mrf.mxu0
    %619 = vmatprep.mubr.f32.mxu0 0.0
    %620 = vmatmul.mubr.f32.gmra.mxu0 %v516
    %v621 = vpop.f32.mrf.mxu0
    %v622 = vadd.f32 0.0, %v621
    %v623 = vpop.f32.mrf.mxu0
    %624 = vmatprep.mubr.f32.mxu0 0.0
    %625 = vmatmul.mubr.f32.gmra.mxu0 %v523
    %v626 = vpop.f32.mrf.mxu0
    %v627 = vadd.f32 0.0, %v626
    %v628 = vpop.f32.mrf.mxu0
    %629 = vdwg.mxu0
    %v630 = vmax.f32 %v607, 1e-10
    %v631 = vmax.f32 %v612, 1e-10
    %v632 = vmax.f32 %v617, 1e-10
    %v633 = vmax.f32 %v622, 1e-10
    %v634 = vmax.f32 %v627, 1e-10
    %v635 = vlog2.pop %v630
    %v636 = vmul.f32 %v635, 0.6931472
    %v637 = vlog2.pop %v631
    %v638 = vmul.f32 %v637, 0.6931472
    %v639 = vlog2.pop %v632
    %v640 = vmul.f32 %v639, 0.6931472
    %v641 = vlog2.pop %v633
    %v642 = vmul.f32 %v641, 0.6931472
    %v643 = vlog2.pop %v634
    %v644 = vmul.f32 %v643, 0.6931472
    %v645 = vmul.f32 %v636, 0.0868589
    %v646 = vmul.f32 %v638, 0.0868589
    %v647 = vmul.f32 %v640, 0.0868589
    %v648 = vmul.f32 %v642, 0.0868589
    %v649 = vmul.f32 %v644, 0.0868589
    %v650 = vadd.f32 %v645, 1.0
    %v651 = vadd.f32 %v646, 1.0
    %v652 = vadd.f32 %v647, 1.0
    %v653 = vadd.f32 %v648, 1.0
    %v654 = vadd.f32 %v649, 1.0
    %v655 = vmax.f32 %v650, 0.0
    %v656 = vmax.f32 %v651, 0.0
    %v657 = vmax.f32 %v652, 0.0
    %v658 = vmax.f32 %v653, 0.0
    %v659 = vmax.f32 %v654, 0.0
    %v660 = vmin.f32 %v655, 1.0
    %v661 = vmin.f32 %v656, 1.0
    %v662 = vmin.f32 %v657, 1.0
    %v663 = vmin.f32 %v658, 1.0
    %v664 = vmin.f32 %v659, 1.0
    %665 = vst [vmem:[#allocation10] sm:$0xff] %v660
    %666 = vst [vmem:[#allocation10 + $0x8] sm:$0xff] %v661
    %667 = vst [vmem:[#allocation10 + $0x10] sm:$0xff] %v662
    %668 = vst [vmem:[#allocation10 + $0x18] sm:$0xff] %v663
    %669 = vst [vmem:[#allocation10 + $0x20] sm:$0xff] %v664
    // Predicated region
    $region34: #{tpu_custom_call.1} parent=1 // pred_check
      _
    $region35: #{tpu_custom_call.1} parent=1 // pred_check_branch
      %671 = sbr.rel (0) target = $region37
    $region36: #{tpu_custom_call.1} parent=1 // pred_region
      %s673 = ssub.s32 640, 640
      %674 = vsyncadd [#allocation4], %s673
      %s675 = sshll.u32 [#allocation10], 4
      %s676 = int_to_ptr.vmem [resolvable:$true] %s675
      %681 = dma.vmem_to_hbm [thread:$0]  %s676, 640, %s4, [#allocation4], 128, 128, 8
    $region37: #{tpu_custom_call.1} parent=1 // pred_fallthru
      _
    // Predicated region
    $region38: #{tpu_custom_call.1} parent=1 // pred_check
      _
    $region39: #{tpu_custom_call.1} parent=1 // pred_check_branch
      %683 = sbr.rel (0) target = $region41
    $region40: #{tpu_custom_call.1} parent=1 // pred_region
      %684 = dma.done [#allocation4], 640
    $region41: #{tpu_custom_call.1} parent=1 // pred_fallthru
      _
    %685 = vsyncpa [#allocation3], 1
    %686 = vsyncpa [#allocation6], 1
    %687 = vsyncpa [#allocation9], 1
    %688 = vsyncpa [#allocation4], 1

</llo_original>
